<compile_context>
chip_gen: v7x
topology: tpu7x:2x2x1
jax: 0.10.0
libtpu: 0.0.40
codegen_flags: <defaults>
</compile_context>

<pallas_src>
import jax
import jax.numpy as jnp
from jax.experimental import pallas as pl
from jax.experimental.pallas import tpu as pltpu


def _gru_ode_kernel(x_ref, h_ref, wx_ref, wh_ref, b_ref, whh_ref, dh_ref):
    """One batch tile of the GRU-ODE cell.

    x_ref:   (bm, I)    input values
    h_ref:   (bm, H)    hidden state
    wx_ref:  (I, 3H)    lin_x.weight^T, gate column order r | z | h-candidate
    wh_ref:  (H, 3H)    [Whr^T | Whz^T | 0]   (candidate block uses r*h)
    b_ref:   (1, 3H)    lin_x.bias (f32), added on the VPU after the dots
    whh_ref: (H, H)     Whh^T
    dh_ref:  (bm, H)    output dh
    """
    hdim = h_ref.shape[1]
    cdt = wx_ref.dtype                        # MXU operand dtype (f32 or bf16)

    h = h_ref[...].astype(jnp.float32)        # f32 copy for elementwise math

    # Two accumulated MXU pushes (f32 accumulation) + VPU bias add.
    pre = (
        jnp.dot(h_ref[...].astype(cdt), wh_ref[...],
                preferred_element_type=jnp.float32)
        + jnp.dot(x_ref[...].astype(cdt), wx_ref[...],
                  preferred_element_type=jnp.float32)
        + b_ref[...]
    )

    r = jax.nn.sigmoid(pre[:, 0 * hdim:1 * hdim])
    z = jax.nn.sigmoid(pre[:, 1 * hdim:2 * hdim])
    u = jnp.tanh(
        pre[:, 2 * hdim:3 * hdim]
        + jnp.dot((r * h).astype(cdt), whh_ref[...],
                  preferred_element_type=jnp.float32)
    )

    # dh = (1 - z) * (u - h)
    dh_ref[...] = ((1.0 - z) * (u - h)).astype(dh_ref.dtype)


def prepare_params(params, *, compute_dtype=jnp.bfloat16):
    """One-time repack of torch-layout weights into the kernel layout.

    compute_dtype: MXU operand dtype for the weights.  bf16 (default) hits the
    v6e/v7x MXU peak and halves weight DMA/VMEM; pass jnp.float32 for the
    strict-accuracy (v5e-safe / stiff-solver) path.  Accumulation and all
    elementwise math are f32 either way.
    """
    wx, bx = params["wx"], params["bx"]                          # (3H, I), (3H,)
    whr, whz, whh = params["whr"], params["whz"], params["whh"]  # (H, H) each

    three_h, input_size = wx.shape
    hidden = three_h // 3

    # x path: x @ wx.T gives columns already in torch.chunk order r | z | h.
    wx_t = wx.T                                                  # (I, 3H)
    # h path: only the r / z gates see h directly; the candidate block uses
    # r*h (separate dot), so its columns are exactly zero here.
    wh = jnp.concatenate(
        [whr.T, whz.T, jnp.zeros((hidden, hidden), whr.dtype)], axis=1)  # (H, 3H)

    return {
        "wx_t": wx_t.astype(compute_dtype),
        "wh": wh.astype(compute_dtype),
        "whh_t": whh.T.astype(compute_dtype),
        "bias": bx.reshape(1, three_h).astype(jnp.float32),      # stays f32
        "hidden": hidden,
        "input_size": input_size,
    }


def _const_spec(shape):
    """BlockSpec for a block that is identical at every grid step.

    Requests single buffering (double-buffering a constant-index block is pure
    VMEM waste); falls back if this Pallas version lacks `pipeline_mode`.
    """
    index_map = lambda i: (0, 0)
    try:
        return pl.BlockSpec(shape, index_map, pipeline_mode=pl.Buffered(1))
    except Exception:  # older Pallas without pipeline_mode / Buffered
        return pl.BlockSpec(shape, index_map)


def full_gru_ode_cell(x, h, prepared, *, max_batch_tile=256):
    """Pallas forward of FullGRUODECell. Returns dh with the shape/dtype of h."""
    wx_t, wh = prepared["wx_t"], prepared["wh"]
    whh_t, bias = prepared["whh_t"], prepared["bias"]
    hidden = prepared["hidden"]
    input_size = prepared["input_size"]

    b = x.shape[0]
    # Single full block for small batches (block == array dims, exempt from
    # the (8,128) rule); 256-row tiles for large ones (full 256-wide MXU rows
    # on v6e/v7x, and >=2 grid points lets v7x's second TensorCore engage).
    bm = b if b <= max_batch_tile else max_batch_tile
    grid = (pl.cdiv(b, bm),)          # ragged tail rows are masked on store
    batch_map = lambda i: (i, 0)

    out = pl.pallas_call(
        _gru_ode_kernel,
        out_shape=jax.ShapeDtypeStruct((b, hidden), h.dtype),
        grid_spec=pltpu.PrefetchScalarGridSpec(
            num_scalar_prefetch=0,
            grid=grid,
            in_specs=[
                pl.BlockSpec((bm, input_size), batch_map),      # x
                pl.BlockSpec((bm, hidden), batch_map),          # h
                _const_spec((input_size, 3 * hidden)),          # Wx
                _const_spec((hidden, 3 * hidden)),              # Wh (r|z|0)
                _const_spec((1, 3 * hidden)),                   # bias
                _const_spec((hidden, hidden)),                  # Whh^T
            ],
            out_specs=pl.BlockSpec((bm, hidden), batch_map),
        ),
        compiler_params=pltpu.CompilerParams(
            dimension_semantics=("parallel",)),
    )(x, h, wx_t, wh, bias, whh_t)
    return out


def _reference(x, h, params):
    """Plain-JAX reference mirroring the PyTorch module exactly."""
    hidden = h.shape[1]
    xproj = x @ params["wx"].T + params["bx"]
    xr, xz, xh = (xproj[:, :hidden], xproj[:, hidden:2 * hidden],
                  xproj[:, 2 * hidden:])
    r = jax.nn.sigmoid(xr + h @ params["whr"].T)
    z = jax.nn.sigmoid(xz + h @ params["whz"].T)
    u = jnp.tanh(xh + (r * h) @ params["whh"].T)
    return (1.0 - z) * (u - h)


def _init_params(key, input_size, hidden_size):
    """Deterministic init, torch.nn.Linear-style uniform(-1/sqrt(fan_in), +)."""
    k = jax.random.split(key, 5)
    bnd_x = 1.0 / jnp.sqrt(input_size)
    bnd_h = 1.0 / jnp.sqrt(hidden_size)
    return {
        "wx": jax.random.uniform(k[0], (3 * hidden_size, input_size),
                                 jnp.float32, -bnd_x, bnd_x),
        "bx": jax.random.uniform(k[1], (3 * hidden_size,),
                                 jnp.float32, -bnd_x, bnd_x),
        "whh": jax.random.uniform(k[2], (hidden_size, hidden_size),
                                  jnp.float32, -bnd_h, bnd_h),
        "whz": jax.random.uniform(k[3], (hidden_size, hidden_size),
                                  jnp.float32, -bnd_h, bnd_h),
        "whr": jax.random.uniform(k[4], (hidden_size, hidden_size),
                                  jnp.float32, -bnd_h, bnd_h),
    }


if __name__ == "__main__":
    B, INPUT_SIZE, HIDDEN = 4, 8, 32

    key = jax.random.PRNGKey(0)
    kp, kx, kh = jax.random.split(key, 3)
    params = _init_params(kp, INPUT_SIZE, HIDDEN)
    x = jax.random.normal(kx, (B, INPUT_SIZE), jnp.float32)
    h = jax.random.normal(kh, (B, HIDDEN), jnp.float32)

    dh_ref = _reference(x, h, params)

    # Strict f32 MXU operands (v5e-safe / tight-tolerance path).
    prep_f32 = prepare_params(params, compute_dtype=jnp.float32)
    dh_f32 = full_gru_ode_cell(x, h, prep_f32)
    jax.block_until_ready(dh_f32)
    assert dh_f32.shape == (B, HIDDEN) and dh_f32.dtype == jnp.float32
    assert jnp.allclose(dh_f32, dh_ref, atol=1e-4, rtol=1e-4), \
        "f32 kernel mismatch vs reference"

    # bf16 MXU operands (v6e/v7x throughput path), f32 accum + f32 elementwise.
    prep_bf16 = prepare_params(params, compute_dtype=jnp.bfloat16)
    dh_bf16 = full_gru_ode_cell(x, h, prep_bf16)
    jax.block_until_ready(dh_bf16)
    assert dh_bf16.shape == (B, HIDDEN) and dh_bf16.dtype == jnp.float32
    assert jnp.allclose(dh_bf16, dh_ref, atol=5e-2, rtol=5e-2), \
        "bf16 kernel mismatch vs reference"

    print("KERNEL_OK")
</pallas_src>

<mosaic_0001>
module attributes {stable_mosaic.version = 11 : i64} {
  func.func @_gru_ode_kernel(%arg0: i32, %arg1: memref<4x8xf32, #tpu.memory_space<vmem>>, %arg2: memref<4x32xf32, #tpu.memory_space<vmem>>, %arg3: memref<8x96xf32, #tpu.memory_space<vmem>>, %arg4: memref<32x96xf32, #tpu.memory_space<vmem>>, %arg5: memref<1x96xf32, #tpu.memory_space<vmem>>, %arg6: memref<32x32xf32, #tpu.memory_space<vmem>>, %arg7: memref<4x32xf32, #tpu.memory_space<vmem>>) attributes {dimension_semantics = [#tpu.dimension_semantics<parallel>], iteration_bounds = array<i64: 1>, scalar_prefetch = 0 : i64, scratch_operands = 0 : i64, tpu.core_type = #tpu.core_type<tc>, window_params = [{transform_indices = @transform_0, window_bounds = array<i64: 4, 8>}, {transform_indices = @transform_1, window_bounds = array<i64: 4, 32>}, {pipeline_mode = #tpu.pipeline_mode<synchronous>, transform_indices = @transform_2, window_bounds = array<i64: 8, 96>}, {pipeline_mode = #tpu.pipeline_mode<synchronous>, transform_indices = @transform_3, window_bounds = array<i64: 32, 96>}, {pipeline_mode = #tpu.pipeline_mode<synchronous>, transform_indices = @transform_4, window_bounds = array<i64: 1, 96>}, {pipeline_mode = #tpu.pipeline_mode<synchronous>, transform_indices = @transform_5, window_bounds = array<i64: 32, 32>}, {transform_indices = @transform_6, window_bounds = array<i64: 4, 32>}]} {
    %c0 = arith.constant 0 : index
    %c0_0 = arith.constant 0 : index
    %0 = vector.load %arg2[%c0, %c0_0] : memref<4x32xf32, #tpu.memory_space<vmem>>, vector<4x32xf32>
    %c0_1 = arith.constant 0 : index
    %c0_2 = arith.constant 0 : index
    %1 = vector.load %arg2[%c0_1, %c0_2] : memref<4x32xf32, #tpu.memory_space<vmem>>, vector<4x32xf32>
    %c0_3 = arith.constant 0 : index
    %c0_4 = arith.constant 0 : index
    %2 = vector.load %arg4[%c0_3, %c0_4] : memref<32x96xf32, #tpu.memory_space<vmem>>, vector<32x96xf32>
    %cst = arith.constant dense<0.000000e+00> : vector<4x96xf32>
    %3 = tpu.matmul %1, %2, %cst {dimension_numbers = #tpu.dot_dimension_numbers<[1], [0], [0], [1], [0, 0, 1, 1], [], []>} : vector<4x32xf32>, vector<32x96xf32>, vector<4x96xf32> -> vector<4x96xf32>
    %c0_5 = arith.constant 0 : index
    %c0_6 = arith.constant 0 : index
    %4 = vector.load %arg1[%c0_5, %c0_6] : memref<4x8xf32, #tpu.memory_space<vmem>>, vector<4x8xf32>
    %c0_7 = arith.constant 0 : index
    %c0_8 = arith.constant 0 : index
    %5 = vector.load %arg3[%c0_7, %c0_8] : memref<8x96xf32, #tpu.memory_space<vmem>>, vector<8x96xf32>
    %cst_9 = arith.constant dense<0.000000e+00> : vector<4x96xf32>
    %6 = tpu.matmul %4, %5, %cst_9 {dimension_numbers = #tpu.dot_dimension_numbers<[1], [0], [0], [1], [0, 0, 1, 1], [], []>} : vector<4x8xf32>, vector<8x96xf32>, vector<4x96xf32> -> vector<4x96xf32>
    %7 = arith.addf %3, %6 : vector<4x96xf32>
    %c0_10 = arith.constant 0 : index
    %c0_11 = arith.constant 0 : index
    %8 = vector.load %arg5[%c0_10, %c0_11] : memref<1x96xf32, #tpu.memory_space<vmem>>, vector<1x96xf32>
    %9 = vector.broadcast %8 : vector<1x96xf32> to vector<4x96xf32>
    %10 = arith.addf %7, %9 : vector<4x96xf32>
    %11 = vector.extract_strided_slice %10 {offsets = [0, 0], sizes = [4, 32], strides = [1, 1]} : vector<4x96xf32> to vector<4x32xf32>
    %12 = arith.negf %11 : vector<4x32xf32>
    %13 = math.exp %12 : vector<4x32xf32>
    %cst_12 = arith.constant 1.000000e+00 : f32
    %14 = vector.broadcast %cst_12 : f32 to vector<4x32xf32>
    %15 = arith.addf %14, %13 : vector<4x32xf32>
    %16 = arith.divf %14, %15 : vector<4x32xf32>
    %17 = vector.extract_strided_slice %10 {offsets = [0, 32], sizes = [4, 32], strides = [1, 1]} : vector<4x96xf32> to vector<4x32xf32>
    %18 = arith.negf %17 : vector<4x32xf32>
    %19 = math.exp %18 : vector<4x32xf32>
    %cst_13 = arith.constant 1.000000e+00 : f32
    %20 = vector.broadcast %cst_13 : f32 to vector<4x32xf32>
    %21 = arith.addf %20, %19 : vector<4x32xf32>
    %22 = arith.divf %20, %21 : vector<4x32xf32>
    %23 = vector.extract_strided_slice %10 {offsets = [0, 64], sizes = [4, 32], strides = [1, 1]} : vector<4x96xf32> to vector<4x32xf32>
    %24 = arith.mulf %16, %0 : vector<4x32xf32>
    %c0_14 = arith.constant 0 : index
    %c0_15 = arith.constant 0 : index
    %25 = vector.load %arg6[%c0_14, %c0_15] : memref<32x32xf32, #tpu.memory_space<vmem>>, vector<32x32xf32>
    %cst_16 = arith.constant dense<0.000000e+00> : vector<4x32xf32>
    %26 = tpu.matmul %24, %25, %cst_16 {dimension_numbers = #tpu.dot_dimension_numbers<[1], [0], [0], [1], [0, 0, 1, 1], [], []>} : vector<4x32xf32>, vector<32x32xf32>, vector<4x32xf32> -> vector<4x32xf32>
    %27 = arith.addf %23, %26 : vector<4x32xf32>
    %28 = math.tanh %27 : vector<4x32xf32>
    %cst_17 = arith.constant 1.000000e+00 : f32
    %29 = vector.broadcast %cst_17 : f32 to vector<4x32xf32>
    %30 = arith.subf %29, %22 : vector<4x32xf32>
    %31 = arith.subf %28, %0 : vector<4x32xf32>
    %32 = arith.mulf %30, %31 : vector<4x32xf32>
    %c0_18 = arith.constant 0 : index
    %c0_19 = arith.constant 0 : index
    %33 = vector.load %arg7[%c0_18, %c0_19] : memref<4x32xf32, #tpu.memory_space<vmem>>, vector<4x32xf32>
    tpu.vector_store %arg7[%c0_18, %c0_19], %32 {strides = array<i32>} : memref<4x32xf32, #tpu.memory_space<vmem>>, vector<4x32xf32>,
    return
  }
  func.func @transform_0(%arg0: i32) -> (i32, i32) {
    %c0_i32 = arith.constant 0 : i32
    %c0_i32_0 = arith.constant 0 : i32
    return %arg0, %c0_i32 : i32, i32
  }
  func.func @transform_1(%arg0: i32) -> (i32, i32) {
    %c0_i32 = arith.constant 0 : i32
    %c0_i32_0 = arith.constant 0 : i32
    return %arg0, %c0_i32 : i32, i32
  }
  func.func @transform_2(%arg0: i32) -> (i32, i32) {
    %c0_i32 = arith.constant 0 : i32
    %c0_i32_0 = arith.constant 0 : i32
    %c0_i32_1 = arith.constant 0 : i32
    return %c0_i32, %c0_i32_0 : i32, i32
  }
  func.func @transform_3(%arg0: i32) -> (i32, i32) {
    %c0_i32 = arith.constant 0 : i32
    %c0_i32_0 = arith.constant 0 : i32
    %c0_i32_1 = arith.constant 0 : i32
    return %c0_i32, %c0_i32_0 : i32, i32
  }
  func.func @transform_4(%arg0: i32) -> (i32, i32) {
    %c0_i32 = arith.constant 0 : i32
    %c0_i32_0 = arith.constant 0 : i32
    %c0_i32_1 = arith.constant 0 : i32
    return %c0_i32, %c0_i32_0 : i32, i32
  }
  func.func @transform_5(%arg0: i32) -> (i32, i32) {
    %c0_i32 = arith.constant 0 : i32
    %c0_i32_0 = arith.constant 0 : i32
    %c0_i32_1 = arith.constant 0 : i32
    return %c0_i32, %c0_i32_0 : i32, i32
  }
  func.func @transform_6(%arg0: i32) -> (i32, i32) {
    %c0_i32 = arith.constant 0 : i32
    %c0_i32_0 = arith.constant 0 : i32
    return %arg0, %c0_i32 : i32, i32
  }
}

</mosaic_0001>

<llo_original>
// kernel: tpu_custom_call.1
$region0: #{tpu_custom_call.1}
  #allocation0 [shape = 'u32[]', space=smem, size = 0x4, offset = 0x4, fixed_abs, tag = 'smem constant byte address 0x4 - core index']
  #allocation1 [shape = 'u32[144,128]{1,0:T(1,128)}', space=vmem, size = 0x12000, scoped, tag = 'internal scratch']
  %s0 = inlined_call_operand.hbm [shape: f32[4,8], index: 0, kind: input, shape index: {}]
  %s1 = inlined_call_operand.hbm [shape: f32[4,32], index: 1, kind: input, shape index: {}]
  %s2 = inlined_call_operand.hbm [shape: f32[8,96], index: 2, kind: input, shape index: {}]
  %s3 = inlined_call_operand.hbm [shape: f32[32,96], index: 3, kind: input, shape index: {}]
  %s4 = inlined_call_operand.vmem [shape: f32[1,96], index: 4, kind: input, shape index: {}]
  %s5 = inlined_call_operand.hbm [shape: f32[32,32], index: 5, kind: input, shape index: {}]
  %s6 = inlined_call_operand.hbm [shape: f32[4,32], index: 6, kind: output, shape index: {}]
  %s7 = sld [smem:[#allocation0]]
  $region54: #{tpu_custom_call.1} parent=0
    _
  %s9 = ssub.s32 1, %s7
  %s10 = scalar_select 0, %s9, %s7
  $region1: #{tpu_custom_call.1} parent=0
    #allocation2 [shape = 'u8[2048]{0}', space=vmem, size = 0x800, scoped, tag = 'input window, operand 0, single buffered']
    #allocation3 [shape = 's32[1]{0}', space=sflag, size = 0x4, scoped, tag = 'scoped memory for tpu_custom_call.1']
    #allocation4 [shape = 's32[1]{0}', space=sflag, size = 0x4, scoped, tag = 'scoped memory for tpu_custom_call.1']
    #allocation5 [shape = 'u8[2048]{0}', space=vmem, size = 0x800, scoped, tag = 'input window, operand 1, single buffered']
    #allocation6 [shape = 's32[1]{0}', space=sflag, size = 0x4, scoped, tag = 'scoped memory for tpu_custom_call.1']
    #allocation7 [shape = 'u8[4096]{0}', space=vmem, size = 0x1000, scoped, tag = 'input window, operand 2, single buffered']
    #allocation8 [shape = 'u8[16384]{0}', space=vmem, size = 0x4000, scoped, tag = 'input window, operand 3, single buffered']
    #allocation9 [shape = 's32[1]{0}', space=sflag, size = 0x4, scoped, tag = 'scoped memory for tpu_custom_call.1']
    #allocation10 [shape = 'u8[16384]{0}', space=vmem, size = 0x4000, scoped, tag = 'input window, operand 5, single buffered']
    #allocation11 [shape = 'u8[2048]{0}', space=vmem, size = 0x800, scoped, tag = 'output window, operand 0, single buffered']
    %11 = vsyncpa [#allocation3], 0
    %12 = vsyncpa [#allocation6], 0
    %13 = vsyncpa [#allocation9], 0
    %14 = vsyncpa [#allocation4], 0
    // Predicated region
    $region2: #{tpu_custom_call.1} parent=1 // pred_check
      _
    $region3: #{tpu_custom_call.1} parent=1 // pred_check_branch
      %16 = sbr.rel (0) target = $region5
    $region4: #{tpu_custom_call.1} parent=1 // pred_region
      %s18 = ssub.s32 64, 64
      %19 = vsyncadd [#allocation3], %s18
      %s21 = sshll.u32 [#allocation2], 4
      %s22 = int_to_ptr.vmem [resolvable:$true] %s21
      %24 = dma.hbm_to_vmem [thread:$0]  %s0, 64, %s22, [#allocation3]
    $region5: #{tpu_custom_call.1} parent=1 // pred_fallthru
      _
    // Predicated region
    $region6: #{tpu_custom_call.1} parent=1 // pred_check
      _
    $region7: #{tpu_custom_call.1} parent=1 // pred_check_branch
      %26 = sbr.rel (0) target = $region9
    $region8: #{tpu_custom_call.1} parent=1 // pred_region
      %s28 = ssub.s32 64, 64
      %29 = vsyncadd [#allocation6], %s28
      %s31 = sshll.u32 [#allocation5], 4
      %s32 = int_to_ptr.vmem [resolvable:$true] %s31
      %34 = dma.hbm_to_vmem [thread:$0]  %s1, 64, %s32, [#allocation6]
    $region9: #{tpu_custom_call.1} parent=1 // pred_fallthru
      _
    // Predicated region
    $region10: #{tpu_custom_call.1} parent=1 // pred_check
      _
    $region11: #{tpu_custom_call.1} parent=1 // pred_check_branch
      %36 = sbr.rel (0) target = $region13
    $region12: #{tpu_custom_call.1} parent=1 // pred_region
      %s38 = ssub.s32 128, 128
      %39 = vsyncadd [#allocation6], %s38
      %s41 = sshll.u32 [#allocation7], 4
      %s42 = int_to_ptr.vmem [resolvable:$true] %s41
      %44 = dma.hbm_to_vmem [thread:$0]  %s2, 128, %s42, [#allocation6]
    $region13: #{tpu_custom_call.1} parent=1 // pred_fallthru
      _
    // Predicated region
    $region14: #{tpu_custom_call.1} parent=1 // pred_check
      _
    $region15: #{tpu_custom_call.1} parent=1 // pred_check_branch
      %46 = sbr.rel (0) target = $region17
    $region16: #{tpu_custom_call.1} parent=1 // pred_region
      %s48 = ssub.s32 512, 512
      %49 = vsyncadd [#allocation9], %s48
      %s50 = sshll.u32 [#allocation8], 4
      %s51 = int_to_ptr.vmem [resolvable:$true] %s50
      %56 = dma.hbm_to_vmem [thread:$0]  %s3, 512, %s51, [#allocation9], 128, 128, 8
    $region17: #{tpu_custom_call.1} parent=1 // pred_fallthru
      _
    // Predicated region
    $region18: #{tpu_custom_call.1} parent=1 // pred_check
      _
    $region19: #{tpu_custom_call.1} parent=1 // pred_check_branch
      %58 = sbr.rel (0) target = $region21
    $region20: #{tpu_custom_call.1} parent=1 // pred_region
      _
    $region21: #{tpu_custom_call.1} parent=1 // pred_fallthru
      _
    // Predicated region
    $region22: #{tpu_custom_call.1} parent=1 // pred_check
      _
    $region23: #{tpu_custom_call.1} parent=1 // pred_check_branch
      %60 = sbr.rel (0) target = $region25
    $region24: #{tpu_custom_call.1} parent=1 // pred_region
      %s62 = ssub.s32 512, 512
      %63 = vsyncadd [#allocation9], %s62
      %s64 = sshll.u32 [#allocation10], 4
      %s65 = int_to_ptr.vmem [resolvable:$true] %s64
      %70 = dma.hbm_to_vmem [thread:$0]  %s5, 512, %s65, [#allocation9], 128, 128, 8
    $region25: #{tpu_custom_call.1} parent=1 // pred_fallthru
      _
    // Predicated region
    $region26: #{tpu_custom_call.1} parent=1 // pred_check
      _
    $region27: #{tpu_custom_call.1} parent=1 // pred_check_branch
      %72 = sbr.rel (0) target = $region29
    $region28: #{tpu_custom_call.1} parent=1 // pred_region
      %73 = dma.done [#allocation3], 64
    $region29: #{tpu_custom_call.1} parent=1 // pred_fallthru
      _
    // Predicated region
    $region30: #{tpu_custom_call.1} parent=1 // pred_check
      _
    $region31: #{tpu_custom_call.1} parent=1 // pred_check_branch
      %75 = sbr.rel (0) target = $region33
    $region32: #{tpu_custom_call.1} parent=1 // pred_region
      %76 = dma.done [#allocation6], 64
    $region33: #{tpu_custom_call.1} parent=1 // pred_fallthru
      _
    // Predicated region
    $region34: #{tpu_custom_call.1} parent=1 // pred_check
      _
    $region35: #{tpu_custom_call.1} parent=1 // pred_check_branch
      %78 = sbr.rel (0) target = $region37
    $region36: #{tpu_custom_call.1} parent=1 // pred_region
      %79 = dma.done [#allocation6], 128
    $region37: #{tpu_custom_call.1} parent=1 // pred_fallthru
      _
    // Predicated region
    $region38: #{tpu_custom_call.1} parent=1 // pred_check
      _
    $region39: #{tpu_custom_call.1} parent=1 // pred_check_branch
      %81 = sbr.rel (0) target = $region41
    $region40: #{tpu_custom_call.1} parent=1 // pred_region
      %82 = dma.done [#allocation9], 512
    $region41: #{tpu_custom_call.1} parent=1 // pred_fallthru
      _
    // Predicated region
    $region42: #{tpu_custom_call.1} parent=1 // pred_check
      _
    $region43: #{tpu_custom_call.1} parent=1 // pred_check_branch
      %84 = sbr.rel (0) target = $region45
    $region44: #{tpu_custom_call.1} parent=1 // pred_region
      %85 = dma.done [#allocation9], 512
    $region45: #{tpu_custom_call.1} parent=1 // pred_fallthru
      _
    %v86 = vld [vmem:[#allocation5] sm:$0xf]
    %v87 = vld [vmem:[#allocation8] sm:$0xff]
    %v88 = vld [vmem:[#allocation8 + $0x8] sm:$0xff]
    %v89 = vld [vmem:[#allocation8 + $0x10] sm:$0xff]
    %v90 = vld [vmem:[#allocation8 + $0x18] sm:$0xff]
    %v91 = vld [vmem:[#allocation2] sm:$0xf]
    %v92 = vld [vmem:[#allocation7] sm:$0xff]
    %vm93 = vcmask 64512
    %v95 = vsel %vm93, %v91, 0
    %97 = vmatprep.subr.mxu0 0.0
    %98 = vmatpush1.msra.mxu0 %v92
    %99 = vmatprep.subr.mxu0 0.0
    %100 = vmatpush1.msra.mxu0 0.0
    %101 = vmatprep.subr.mxu0 0.0
    %102 = vmatpush1.msra.mxu0 0.0
    %103 = vmatprep.subr.mxu0 0.0
    %104 = vmatpush1.msra.mxu0 0.0
    %105 = vmatprep.subr.mxu0 0.0
    %106 = vmatpush1.msra.mxu0 0.0
    %107 = vmatprep.subr.mxu0 0.0
    %108 = vmatpush1.msra.mxu0 0.0
    %109 = vmatprep.subr.mxu0 0.0
    %110 = vmatpush1.msra.mxu0 0.0
    %111 = vmatprep.subr.mxu0 0.0
    %112 = vmatpush1.msra.mxu0 0.0
    %113 = vmatprep.subr.mxu0 0.0
    %114 = vmatpush1.msra.mxu0 0.0
    %115 = vmatprep.subr.mxu0 0.0
    %116 = vmatpush1.msra.mxu0 0.0
    %117 = vmatprep.subr.mxu0 0.0
    %118 = vmatpush1.msra.mxu0 0.0
    %119 = vmatprep.subr.mxu0 0.0
    %120 = vmatpush1.msra.mxu0 0.0
    %121 = vmatprep.subr.mxu0 0.0
    %122 = vmatpush1.msra.mxu0 0.0
    %123 = vmatprep.subr.mxu0 0.0
    %124 = vmatpush1.msra.mxu0 0.0
    %125 = vmatprep.subr.mxu0 0.0
    %126 = vmatpush1.msra.mxu0 0.0
    %127 = vmatprep.subr.mxu0 0.0
    %128 = vmatpush1.msra.mxu0 0.0
    %129 = vmatprep.subr.mxu0 0.0
    %130 = vmatpush1.msra.mxu0 0.0
    %131 = vmatprep.subr.mxu0 0.0
    %132 = vmatpush1.msra.mxu0 0.0
    %133 = vmatprep.subr.mxu0 0.0
    %134 = vmatpush1.msra.mxu0 0.0
    %135 = vmatprep.subr.mxu0 0.0
    %136 = vmatpush1.msra.mxu0 0.0
    %137 = vmatprep.subr.mxu0 0.0
    %138 = vmatpush1.msra.mxu0 0.0
    %139 = vmatprep.subr.mxu0 0.0
    %140 = vmatpush1.msra.mxu0 0.0
    %141 = vmatprep.subr.mxu0 0.0
    %142 = vmatpush1.msra.mxu0 0.0
    %143 = vmatprep.subr.mxu0 0.0
    %144 = vmatpush1.msra.mxu0 0.0
    %145 = vmatprep.subr.mxu0 0.0
    %146 = vmatpush1.msra.mxu0 0.0
    %147 = vmatprep.subr.mxu0 0.0
    %148 = vmatpush1.msra.mxu0 0.0
    %149 = vmatprep.subr.mxu0 0.0
    %150 = vmatpush1.msra.mxu0 0.0
    %151 = vmatprep.subr.mxu0 0.0
    %152 = vmatpush1.msra.mxu0 0.0
    %153 = vmatprep.subr.mxu0 0.0
    %154 = vmatpush1.msra.mxu0 0.0
    %155 = vmatprep.subr.mxu0 0.0
    %156 = vmatpush1.msra.mxu0 0.0
    %157 = vmatprep.subr.mxu0 0.0
    %158 = vmatpush1.msra.mxu0 0.0
    %159 = vmatprep.subr.mxu0 0.0
    %160 = vmatpush1.msra.mxu0 0.0
    %161 = vmatprep.mubr.f32.mxu0 0.0
    %162 = vmatmul.mubr.f32.gmra.mrb[0].mxu0 %v95
    %v163 = vpop.f32.mrb[0].mxu0
    %v164 = vadd.f32 0.0, %v163
    %v165 = vpop.f32.mrb[0].mxu0
    %166 = vdwg.mxu0
    %vm167 = vcmask 261120
    %v169 = vsel %vm167, %v86, 0
    %171 = vmatprep.subr.mxu0 0.0
    %172 = vmatpush1.msra.mxu0 %v87
    %173 = vmatprep.subr.mxu0 0.0
    %174 = vmatpush1.msra.mxu0 %v88
    %175 = vmatprep.subr.mxu0 0.0
    %176 = vmatpush1.msra.mxu0 %v89
    %177 = vmatprep.subr.mxu0 0.0
    %178 = vmatpush1.msra.mxu0 %v90
    %179 = vmatprep.subr.mxu0 0.0
    %180 = vmatpush1.msra.mxu0 0.0
    %181 = vmatprep.subr.mxu0 0.0
    %182 = vmatpush1.msra.mxu0 0.0
    %183 = vmatprep.subr.mxu0 0.0
    %184 = vmatpush1.msra.mxu0 0.0
    %185 = vmatprep.subr.mxu0 0.0
    %186 = vmatpush1.msra.mxu0 0.0
    %187 = vmatprep.subr.mxu0 0.0
    %188 = vmatpush1.msra.mxu0 0.0
    %189 = vmatprep.subr.mxu0 0.0
    %190 = vmatpush1.msra.mxu0 0.0
    %191 = vmatprep.subr.mxu0 0.0
    %192 = vmatpush1.msra.mxu0 0.0
    %193 = vmatprep.subr.mxu0 0.0
    %194 = vmatpush1.msra.mxu0 0.0
    %195 = vmatprep.subr.mxu0 0.0
    %196 = vmatpush1.msra.mxu0 0.0
    %197 = vmatprep.subr.mxu0 0.0
    %198 = vmatpush1.msra.mxu0 0.0
    %199 = vmatprep.subr.mxu0 0.0
    %200 = vmatpush1.msra.mxu0 0.0
    %201 = vmatprep.subr.mxu0 0.0
    %202 = vmatpush1.msra.mxu0 0.0
    %203 = vmatprep.subr.mxu0 0.0
    %204 = vmatpush1.msra.mxu0 0.0
    %205 = vmatprep.subr.mxu0 0.0
    %206 = vmatpush1.msra.mxu0 0.0
    %207 = vmatprep.subr.mxu0 0.0
    %208 = vmatpush1.msra.mxu0 0.0
    %209 = vmatprep.subr.mxu0 0.0
    %210 = vmatpush1.msra.mxu0 0.0
    %211 = vmatprep.subr.mxu0 0.0
    %212 = vmatpush1.msra.mxu0 0.0
    %213 = vmatprep.subr.mxu0 0.0
    %214 = vmatpush1.msra.mxu0 0.0
    %215 = vmatprep.subr.mxu0 0.0
    %216 = vmatpush1.msra.mxu0 0.0
    %217 = vmatprep.subr.mxu0 0.0
    %218 = vmatpush1.msra.mxu0 0.0
    %219 = vmatprep.subr.mxu0 0.0
    %220 = vmatpush1.msra.mxu0 0.0
    %221 = vmatprep.subr.mxu0 0.0
    %222 = vmatpush1.msra.mxu0 0.0
    %223 = vmatprep.subr.mxu0 0.0
    %224 = vmatpush1.msra.mxu0 0.0
    %225 = vmatprep.subr.mxu0 0.0
    %226 = vmatpush1.msra.mxu0 0.0
    %227 = vmatprep.subr.mxu0 0.0
    %228 = vmatpush1.msra.mxu0 0.0
    %229 = vmatprep.subr.mxu0 0.0
    %230 = vmatpush1.msra.mxu0 0.0
    %231 = vmatprep.subr.mxu0 0.0
    %232 = vmatpush1.msra.mxu0 0.0
    %233 = vmatprep.subr.mxu0 0.0
    %234 = vmatpush1.msra.mxu0 0.0
    %235 = vmatprep.mubr.f32.mxu0 0.0
    %236 = vmatmul.mubr.f32.gmra.mrb[0].mxu0 %v169
    %v237 = vpop.f32.mrb[0].mxu0
    %v238 = vadd.f32 %v164, %v237
    %v239 = vpop.f32.mrb[0].mxu0
    %240 = vdwg.mxu0
    %v241 = vld [vmem:[%s4] sm:$0x1]
    %v243 = vlaneseq
    %v244 = vshrl.u32 %v243, 7
    %v245 = vsub.s32 0, %v244
    %v246 = vrot.slane %v241, %v245
    %v248 = vadd.f32 %v238, %v246
    %v249 = vxor.u32 %v248, 2147483648
    %v250 = vmul.f32 %v249, 1.442695
    %v251 = vpow.pop %v250
    %v252 = vadd.f32 %v251, 1.0
    %v253 = vrcp.pop %v252
    %v254 = vmul.f32 1.0, %v253
    %v255 = vmul.f32 %v254, %v86
    %v256 = vld [vmem:[#allocation10] sm:$0xff]
    %v257 = vld [vmem:[#allocation10 + $0x8] sm:$0xff]
    %v258 = vld [vmem:[#allocation10 + $0x10] sm:$0xff]
    %v259 = vld [vmem:[#allocation10 + $0x18] sm:$0xff]
    %v261 = vsel %vm167, %v255, 0
    %263 = vmatprep.subr.mxu0 0.0
    %264 = vmatpush1.msra.mxu0 %v256
    %265 = vmatprep.subr.mxu0 0.0
    %266 = vmatpush1.msra.mxu0 %v257
    %267 = vmatprep.subr.mxu0 0.0
    %268 = vmatpush1.msra.mxu0 %v258
    %269 = vmatprep.subr.mxu0 0.0
    %270 = vmatpush1.msra.mxu0 %v259
    %271 = vmatprep.subr.mxu0 0.0
    %272 = vmatpush1.msra.mxu0 0.0
    %273 = vmatprep.subr.mxu0 0.0
    %274 = vmatpush1.msra.mxu0 0.0
    %275 = vmatprep.subr.mxu0 0.0
    %276 = vmatpush1.msra.mxu0 0.0
    %277 = vmatprep.subr.mxu0 0.0
    %278 = vmatpush1.msra.mxu0 0.0
    %279 = vmatprep.subr.mxu0 0.0
    %280 = vmatpush1.msra.mxu0 0.0
    %281 = vmatprep.subr.mxu0 0.0
    %282 = vmatpush1.msra.mxu0 0.0
    %283 = vmatprep.subr.mxu0 0.0
    %284 = vmatpush1.msra.mxu0 0.0
    %285 = vmatprep.subr.mxu0 0.0
    %286 = vmatpush1.msra.mxu0 0.0
    %287 = vmatprep.subr.mxu0 0.0
    %288 = vmatpush1.msra.mxu0 0.0
    %289 = vmatprep.subr.mxu0 0.0
    %290 = vmatpush1.msra.mxu0 0.0
    %291 = vmatprep.subr.mxu0 0.0
    %292 = vmatpush1.msra.mxu0 0.0
    %293 = vmatprep.subr.mxu0 0.0
    %294 = vmatpush1.msra.mxu0 0.0
    %295 = vmatprep.subr.mxu0 0.0
    %296 = vmatpush1.msra.mxu0 0.0
    %297 = vmatprep.subr.mxu0 0.0
    %298 = vmatpush1.msra.mxu0 0.0
    %299 = vmatprep.subr.mxu0 0.0
    %300 = vmatpush1.msra.mxu0 0.0
    %301 = vmatprep.subr.mxu0 0.0
    %302 = vmatpush1.msra.mxu0 0.0
    %303 = vmatprep.subr.mxu0 0.0
    %304 = vmatpush1.msra.mxu0 0.0
    %305 = vmatprep.subr.mxu0 0.0
    %306 = vmatpush1.msra.mxu0 0.0
    %307 = vmatprep.subr.mxu0 0.0
    %308 = vmatpush1.msra.mxu0 0.0
    %309 = vmatprep.subr.mxu0 0.0
    %310 = vmatpush1.msra.mxu0 0.0
    %311 = vmatprep.subr.mxu0 0.0
    %312 = vmatpush1.msra.mxu0 0.0
    %313 = vmatprep.subr.mxu0 0.0
    %314 = vmatpush1.msra.mxu0 0.0
    %315 = vmatprep.subr.mxu0 0.0
    %316 = vmatpush1.msra.mxu0 0.0
    %317 = vmatprep.subr.mxu0 0.0
    %318 = vmatpush1.msra.mxu0 0.0
    %319 = vmatprep.subr.mxu0 0.0
    %320 = vmatpush1.msra.mxu0 0.0
    %321 = vmatprep.subr.mxu0 0.0
    %322 = vmatpush1.msra.mxu0 0.0
    %323 = vmatprep.subr.mxu0 0.0
    %324 = vmatpush1.msra.mxu0 0.0
    %325 = vmatprep.subr.mxu0 0.0
    %326 = vmatpush1.msra.mxu0 0.0
    %327 = vmatprep.mubr.f32.mxu0 0.0
    %328 = vmatmul.mubr.f32.gmra.mrb[0].mxu0 %v261
    %v329 = vpop.f32.mrb[0].mxu0
    %v330 = vadd.f32 0.0, %v329
    %v331 = vpop.f32.mrb[0].mxu0
    %332 = vdwg.mxu0
    %334 = vrot.lane.b32.xlu0 %v330, 64
    %v335 = vpop.permute.xlu0 %334
    %v337 = vadd.f32 %v248, %v335
    %v338 = vtanh.pop %v337
    %v339 = vsub.f32 1.0, %v254
    %340 = vrot.lane.b32.xlu0 %v86, 64
    %v341 = vpop.permute.xlu0 %340
    %v343 = vsub.f32 %v338, %v341
    %345 = vrot.lane.b32.xlu0 %v343, 96
    %v346 = vpop.permute.xlu0 %345
    %v348 = vmul.f32 %v339, %v346
    %350 = vrot.lane.b32.xlu0 %v348, 96
    %v351 = vpop.permute.xlu0 %350
    %vm353 = vcmask 257024
    %354 = vst.msk [vmem:[#allocation11] sm:$0xf] %vm353, %v351
    // Predicated region
    $region46: #{tpu_custom_call.1} parent=1 // pred_check
      _
    $region47: #{tpu_custom_call.1} parent=1 // pred_check_branch
      %356 = sbr.rel (0) target = $region49
    $region48: #{tpu_custom_call.1} parent=1 // pred_region
      %s358 = ssub.s32 64, 64
      %359 = vsyncadd [#allocation4], %s358
      %s361 = sshll.u32 [#allocation11], 4
      %s362 = int_to_ptr.vmem [resolvable:$true] %s361
      %364 = dma.vmem_to_hbm [thread:$0]  %s362, 64, %s6, [#allocation4]
    $region49: #{tpu_custom_call.1} parent=1 // pred_fallthru
      _
    // Predicated region
    $region50: #{tpu_custom_call.1} parent=1 // pred_check
      _
    $region51: #{tpu_custom_call.1} parent=1 // pred_check_branch
      %366 = sbr.rel (0) target = $region53
    $region52: #{tpu_custom_call.1} parent=1 // pred_region
      %367 = dma.done [#allocation4], 64
    $region53: #{tpu_custom_call.1} parent=1 // pred_fallthru
      _
    %368 = vsyncpa [#allocation3], 1
    %369 = vsyncpa [#allocation6], 1
    %370 = vsyncpa [#allocation9], 1
    %371 = vsyncpa [#allocation4], 1

</llo_original>
